<compile_context>
chip_gen: v6e
topology: v6e:2x2x1
jax: 0.10.0
libtpu: 0.0.40
codegen_flags: <defaults>
</compile_context>

<pallas_src>
import math

import jax
import jax.numpy as jnp
from jax.experimental import pallas as pl
from jax.experimental.pallas import tpu as pltpu


# ----------------------------------------------------------------------------
# helpers
# ----------------------------------------------------------------------------
def _round_up(a: int, b: int) -> int:
    return (a + b - 1) // b * b


def _pick_tile(dim: int, unit: int, max_tile: int) -> int:
    """Pick a tile (multiple of `unit`, <= max_tile) minimizing the padded
    extent of `dim`; among equal padding prefer the largest tile (fewer grid
    steps)."""
    max_tile = max(unit, (max_tile // unit) * unit)
    target = _round_up(dim, unit)
    if target <= max_tile:          # whole dim fits in one tile
        return target
    best_pad, best_t = None, unit
    t = unit
    while t <= max_tile:
        padded = _round_up(dim, t)
        if best_pad is None or padded < best_pad or (padded == best_pad and t > best_t):
            best_pad, best_t = padded, t
        t += unit
    return best_t


def _vmem_limit_bytes(needed: int) -> int:
    """Generation-aware scoped-VMEM limit with headroom for Mosaic scratch."""
    try:
        cap = int(pltpu.get_tpu_info().vmem_capacity_bytes)
    except Exception:
        cap = 64 << 20  # conservative fallback: v7x-sized VMEM
    if cap <= (64 << 20):
        # v7x-class: never request the full physical VMEM.
        ceiling = cap - (8 << 20)
    else:
        # 128 MiB generations (v5e/v6e): allow big tiles / deep buffering.
        ceiling = min(cap - (28 << 20), 100 << 20)
    return int(min(max(needed, 32 << 20), ceiling))


def _weight_spec(tk: int, tn: int, n_bufs: int) -> pl.BlockSpec:
    idx = lambda i, j, k: (k, j)
    if n_bufs != 2:
        try:
            return pl.BlockSpec((tk, tn), idx, pipeline_mode=pl.Buffered(n_bufs))
        except Exception:
            pass  # older jax without pipeline_mode: fall back to default 2-deep
    return pl.BlockSpec((tk, tn), idx)


def transpose_linear_weight(weight):
    """Pre-transpose a PyTorch-layout (out_features, in_features) weight to
    (in_features, out_features).  Call ONCE at init / weight-load time and use
    weight_layout="kn" so the per-call hot path never pays an HBM transpose."""
    return jnp.transpose(jnp.asarray(weight))


# ----------------------------------------------------------------------------
# kernels: accumulate directly into the (resident, f32) output tile
# ----------------------------------------------------------------------------
def _linear_kernel(x_ref, wt_ref, o_ref):
    k = pl.program_id(2)
    part = jnp.dot(x_ref[...], wt_ref[...], preferred_element_type=jnp.float32)

    @pl.when(k == 0)
    def _():
        o_ref[...] = part

    @pl.when(k > 0)
    def _():
        o_ref[...] += part


def _linear_bias_kernel(x_ref, wt_ref, b_ref, o_ref):
    k = pl.program_id(2)
    part = jnp.dot(x_ref[...], wt_ref[...], preferred_element_type=jnp.float32)

    @pl.when(k == 0)
    def _():
        o_ref[...] = part

    @pl.when(k > 0)
    def _():
        o_ref[...] += part

    @pl.when(k == pl.num_programs(2) - 1)
    def _():
        o_ref[...] += b_ref[...]          # (1, tn) broadcast over (tm, tn)


# ----------------------------------------------------------------------------
# wrapper
# ----------------------------------------------------------------------------
def custom_linear(x, weight, bias=None, *, weight_layout="nk",
                  tm=None, tn=None, tk=None, compute_dtype=None):
    """Pallas equivalent of custom_Linear_function.forward: x @ weight.T + bias.

    x:      (M, K) float32
    weight: (N, K) if weight_layout == "nk" (PyTorch), or (K, N) if "kn"
            (pre-transposed via transpose_linear_weight — preferred hot path)
    bias:   (N,) float32 or None
    compute_dtype: optional (e.g. jnp.bfloat16) low-precision matmul operands;
            accumulation stays f32.  Deviates from PyTorch f32 numerics.
    returns (M, N) float32
    """
    M, K = x.shape
    if weight_layout == "nk":
        N, Kw = weight.shape
        wt = jnp.transpose(weight)  # one-time HBM transpose; hoist via
                                    # transpose_linear_weight() for reused layers
    elif weight_layout == "kn":
        Kw, N = weight.shape
        wt = weight
    else:
        raise ValueError(f"unknown weight_layout {weight_layout!r}")
    assert K == Kw, "in_features mismatch"

    # ---- tile selection -----------------------------------------------------
    small_m = M <= 256
    tm_max = tm if tm is not None else 512
    tn_max = tn if tn is not None else (1024 if small_m else 512)
    tk_max = tk if tk is not None else (1024 if small_m else 512)

    tm_ = _pick_tile(M, 8, tm_max)
    tn_ = _pick_tile(N, 128, tn_max)
    tk_ = _pick_tile(K, 128, tk_max)

    Mp, Np, Kp = _round_up(M, tm_), _round_up(N, tn_), _round_up(K, tk_)

    # v7x megacore: if both parallel axes collapse to one block, split tn so
    # the j axis has >= 2 blocks (harmless elsewhere: problem is tiny anyway).
    if Mp // tm_ == 1 and Np // tn_ == 1 and _round_up(N, 128) >= 256 and tn is None:
        lanes = _round_up(N, 128) // 128
        tn_ = 128 * max(1, lanes // 2)
        Np = _round_up(N, tn_)

    grid = (Mp // tm_, Np // tn_, Kp // tk_)

    # ---- padding (only when needed) ----------------------------------------
    xp = x if (Mp == M and Kp == K) else jnp.pad(x, ((0, Mp - M), (0, Kp - K)))
    wtp = wt if (Kp == K and Np == N) else jnp.pad(wt, ((0, Kp - K), (0, Np - N)))
    if compute_dtype is not None:
        xp = xp.astype(compute_dtype)
        wtp = wtp.astype(compute_dtype)

    # ---- specs / compiler params --------------------------------------------
    x_spec = pl.BlockSpec((tm_, tk_), lambda i, j, k: (i, k))
    o_spec = pl.BlockSpec((tm_, tn_), lambda i, j, k: (i, j))
    w_bufs = 3 if (small_m and grid[2] >= 3) else 2
    w_spec = _weight_spec(tk_, tn_, w_bufs)

    itemsize = 2 if compute_dtype == jnp.bfloat16 else 4
    needed = (itemsize * (2 * tm_ * tk_ + w_bufs * tk_ * tn_)
              + 4 * (2 * tn_ + 2 * tm_ * tn_) + (2 << 20))
    compiler_params = pltpu.CompilerParams(
        dimension_semantics=("parallel", "parallel", "arbitrary"),
        vmem_limit_bytes=_vmem_limit_bytes(needed),
    )
    cost = pl.CostEstimate(
        flops=2 * M * N * K,
        transcendentals=0,
        bytes_accessed=itemsize * (M * K + N * K) + 4 * M * N
        + (4 * N if bias is not None else 0),
    )

    out_shape = jax.ShapeDtypeStruct((Mp, Np), jnp.float32)

    if bias is None:
        out = pl.pallas_call(
            _linear_kernel,
            out_shape=out_shape,
            grid_spec=pltpu.PrefetchScalarGridSpec(
                num_scalar_prefetch=0, grid=grid,
                in_specs=[x_spec, w_spec], out_specs=o_spec),
            compiler_params=compiler_params,
            cost_estimate=cost,
        )(xp, wtp)
    else:
        bp = bias.astype(jnp.float32)
        if Np != N:
            bp = jnp.pad(bp, ((0, Np - N),))
        b2d = bp.reshape(1, Np)
        b_spec = pl.BlockSpec((1, tn_), lambda i, j, k: (0, j))
        out = pl.pallas_call(
            _linear_bias_kernel,
            out_shape=out_shape,
            grid_spec=pltpu.PrefetchScalarGridSpec(
                num_scalar_prefetch=0, grid=grid,
                in_specs=[x_spec, w_spec, b_spec], out_specs=o_spec),
            compiler_params=compiler_params,
            cost_estimate=cost,
        )(xp, wtp, b2d)

    if (Mp, Np) != (M, N):
        out = out[:M, :N]
    return out


# ----------------------------------------------------------------------------
# parameter init (deterministic re-implementation of reset_parameters)
# ----------------------------------------------------------------------------
def init_custom_linear_params(key, input_features, output_features, bias=True):
    k_w, k_b = jax.random.split(key)
    fan_in = input_features
    # kaiming_uniform_(a=sqrt(5)) -> bound = sqrt(6/((1+a^2)*fan_in)) = 1/sqrt(fan_in)
    bound = 1.0 / math.sqrt(fan_in)
    weight = jax.random.uniform(
        k_w, (output_features, input_features), jnp.float32,
        minval=-bound, maxval=bound)
    b = None
    if bias:
        b = jax.random.uniform(
            k_b, (output_features,), jnp.float32, minval=-bound, maxval=bound)
    return weight, b


# ----------------------------------------------------------------------------
# demo / self-test
# ----------------------------------------------------------------------------
if __name__ == "__main__":
    key = jax.random.PRNGKey(0)
    k_x, k_p, k_x2, k_p2 = jax.random.split(key, 4)

    def ref_linear(xv, wv, bv=None):
        out = jax.lax.dot_general(
            xv, wv, (((1,), (1,)), ((), ())),
            precision=jax.lax.Precision.HIGHEST)
        return out if bv is None else out + bv[None, :]

    # --- 1) small demo: bias, PyTorch (N, K) layout, single tile -------------
    batch, in_f, out_f = 8, 32, 16
    x = jax.random.normal(k_x, (batch, in_f), jnp.float32)
    w, b = init_custom_linear_params(k_p, in_f, out_f, bias=True)
    out = jax.block_until_ready(custom_linear(x, w, b))
    assert out.shape == (batch, out_f)
    assert jnp.allclose(out, ref_linear(x, w, b), atol=5e-3, rtol=5e-3), \
        "bias path mismatch vs reference"

    # --- 2) multi-tile: K reduction over 3 steps + ragged M/N padding --------
    M2, K2, N2 = 16, 384, 272
    x2 = jax.random.normal(k_x2, (M2, K2), jnp.float32)
    w2, b2 = init_custom_linear_params(k_p2, K2, N2, bias=True)
    out2 = jax.block_until_ready(custom_linear(x2, w2, b2, tm=8, tn=128, tk=128))
    assert out2.shape == (M2, N2)
    assert jnp.allclose(out2, ref_linear(x2, w2, b2), atol=5e-3, rtol=5e-3), \
        "tiled path mismatch vs reference"

    # --- 3) no-bias, pre-transposed (K, N) weight (hot-path layout), auto tiles
    w2_t = transpose_linear_weight(w2)
    out3 = jax.block_until_ready(custom_linear(x2, w2_t, None, weight_layout="kn"))
    assert out3.shape == (M2, N2)
    assert jnp.allclose(out3, ref_linear(x2, w2), atol=5e-3, rtol=5e-3), \
        "no-bias / pre-transposed path mismatch vs reference"

    print("KERNEL_OK")
</pallas_src>

<mosaic_0001>
module attributes {stable_mosaic.version = 11 : i64} {
  func.func @_linear_bias_kernel(%arg0: i32, %arg1: i32, %arg2: i32, %arg3: memref<8x128xf32, #tpu.memory_space<vmem>>, %arg4: memref<128x128xf32, #tpu.memory_space<vmem>>, %arg5: memref<1x128xf32, #tpu.memory_space<vmem>>, %arg6: memref<8x128xf32, #tpu.memory_space<vmem>>) attributes {dimension_semantics = [#tpu.dimension_semantics<parallel>, #tpu.dimension_semantics<parallel>, #tpu.dimension_semantics<arbitrary>], iteration_bounds = array<i64: 1, 1, 1>, scalar_prefetch = 0 : i64, scratch_operands = 0 : i64, tpu.core_type = #tpu.core_type<tc>, window_params = [{transform_indices = @transform_0, window_bounds = array<i64: 8, 128>}, {transform_indices = @transform_1, window_bounds = array<i64: 128, 128>}, {transform_indices = @transform_2, window_bounds = array<i64: 1, 128>}, {transform_indices = @transform_3, window_bounds = array<i64: 8, 128>}]} {
    %c0 = arith.constant 0 : index
    %c0_0 = arith.constant 0 : index
    %0 = vector.load %arg3[%c0, %c0_0] : memref<8x128xf32, #tpu.memory_space<vmem>>, vector<8x128xf32>
    %c0_1 = arith.constant 0 : index
    %c0_2 = arith.constant 0 : index
    %1 = vector.load %arg4[%c0_1, %c0_2] : memref<128x128xf32, #tpu.memory_space<vmem>>, vector<128x128xf32>
    %cst = arith.constant dense<0.000000e+00> : vector<8x128xf32>
    %2 = tpu.matmul %0, %1, %cst {dimension_numbers = #tpu.dot_dimension_numbers<[1], [0], [0], [1], [0, 0, 1, 1], [], []>} : vector<8x128xf32>, vector<128x128xf32>, vector<8x128xf32> -> vector<8x128xf32>
    %c0_i32 = arith.constant 0 : i32
    %3 = arith.cmpi eq, %arg2, %c0_i32 : i32
    %4 = arith.extui %3 : i1 to i32
    %c0_i32_3 = arith.constant 0 : i32
    %5 = arith.cmpi ne, %4, %c0_i32_3 : i32
    scf.if %5 {
      %c0_8 = arith.constant 0 : index
      %c0_9 = arith.constant 0 : index
      %12 = vector.load %arg6[%c0_8, %c0_9] : memref<8x128xf32, #tpu.memory_space<vmem>>, vector<8x128xf32>
      tpu.vector_store %arg6[%c0_8, %c0_9], %2 {strides = array<i32>} : memref<8x128xf32, #tpu.memory_space<vmem>>, vector<8x128xf32>,
    } else {
    }
    %c0_i32_4 = arith.constant 0 : i32
    %6 = arith.cmpi sgt, %arg2, %c0_i32_4 : i32
    %7 = arith.extui %6 : i1 to i32
    %c0_i32_5 = arith.constant 0 : i32
    %8 = arith.cmpi ne, %7, %c0_i32_5 : i32
    scf.if %8 {
      %c0_8 = arith.constant 0 : index
      %c0_9 = arith.constant 0 : index
      %12 = vector.load %arg6[%c0_8, %c0_9] : memref<8x128xf32, #tpu.memory_space<vmem>>, vector<8x128xf32>
      %13 = arith.addf %12, %2 : vector<8x128xf32>
      %c0_10 = arith.constant 0 : index
      %c0_11 = arith.constant 0 : index
      %14 = vector.load %arg6[%c0_10, %c0_11] : memref<8x128xf32, #tpu.memory_space<vmem>>, vector<8x128xf32>
      tpu.vector_store %arg6[%c0_10, %c0_11], %13 {strides = array<i32>} : memref<8x128xf32, #tpu.memory_space<vmem>>, vector<8x128xf32>,
    } else {
    }
    %c0_i32_6 = arith.constant 0 : i32
    %9 = arith.cmpi eq, %arg2, %c0_i32_6 : i32
    %10 = arith.extui %9 : i1 to i32
    %c0_i32_7 = arith.constant 0 : i32
    %11 = arith.cmpi ne, %10, %c0_i32_7 : i32
    scf.if %11 {
      %c0_8 = arith.constant 0 : index
      %c0_9 = arith.constant 0 : index
      %12 = vector.load %arg6[%c0_8, %c0_9] : memref<8x128xf32, #tpu.memory_space<vmem>>, vector<8x128xf32>
      %c0_10 = arith.constant 0 : index
      %c0_11 = arith.constant 0 : index
      %13 = vector.load %arg5[%c0_10, %c0_11] : memref<1x128xf32, #tpu.memory_space<vmem>>, vector<1x128xf32>
      %14 = vector.broadcast %13 : vector<1x128xf32> to vector<8x128xf32>
      %15 = arith.addf %12, %14 : vector<8x128xf32>
      %c0_12 = arith.constant 0 : index
      %c0_13 = arith.constant 0 : index
      %16 = vector.load %arg6[%c0_12, %c0_13] : memref<8x128xf32, #tpu.memory_space<vmem>>, vector<8x128xf32>
      tpu.vector_store %arg6[%c0_12, %c0_13], %15 {strides = array<i32>} : memref<8x128xf32, #tpu.memory_space<vmem>>, vector<8x128xf32>,
    } else {
    }
    return
  }
  func.func @transform_0(%arg0: i32, %arg1: i32, %arg2: i32) -> (i32, i32) {
    %c0_i32 = arith.constant 0 : i32
    return %arg0, %arg2 : i32, i32
  }
  func.func @transform_1(%arg0: i32, %arg1: i32, %arg2: i32) -> (i32, i32) {
    %c0_i32 = arith.constant 0 : i32
    return %arg2, %arg1 : i32, i32
  }
  func.func @transform_2(%arg0: i32, %arg1: i32, %arg2: i32) -> (i32, i32) {
    %c0_i32 = arith.constant 0 : i32
    %c0_i32_0 = arith.constant 0 : i32
    return %c0_i32, %arg1 : i32, i32
  }
  func.func @transform_3(%arg0: i32, %arg1: i32, %arg2: i32) -> (i32, i32) {
    %c0_i32 = arith.constant 0 : i32
    return %arg0, %arg1 : i32, i32
  }
}

</mosaic_0001>

<llo_original>
// kernel: tpu_custom_call.1
$region0: #{tpu_custom_call.1}
  #allocation0 [shape = 'u32[]', space=smem, size = 0x4, offset = 0x4, fixed_abs, tag = 'smem constant byte address 0x4 - core index']
  #allocation1 [shape = 'u32[144,128]{1,0:T(1,128)}', space=vmem, size = 0x12000, scoped, tag = 'internal scratch']
  %s0 = inlined_call_operand.hbm [shape: f32[8,128], index: 0, kind: input, shape index: {}]
  %s1 = inlined_call_operand.hbm [shape: f32[128,128], index: 1, kind: input, shape index: {}]
  %s2 = inlined_call_operand.vmem [shape: f32[1,128], index: 2, kind: input, shape index: {}]
  %s3 = inlined_call_operand.hbm [shape: f32[8,128], index: 3, kind: output, shape index: {}]
  %s4 = sld [smem:[#allocation0]]
  $region42: #{tpu_custom_call.1} parent=0
    _
  %s6 = ssub.s32 1, %s4
  %s7 = scalar_select 0, %s6, %s4
  $region1: #{tpu_custom_call.1} parent=0
    #allocation2 [shape = 'u8[4096]{0}', space=vmem, size = 0x1000, scoped, tag = 'input window, operand 0, single buffered']
    #allocation3 [shape = 's32[1]{0}', space=sflag, size = 0x4, scoped, tag = 'scoped memory for tpu_custom_call.1']
    #allocation4 [shape = 's32[1]{0}', space=sflag, size = 0x4, scoped, tag = 'scoped memory for tpu_custom_call.1']
    #allocation5 [shape = 'u8[65536]{0}', space=vmem, size = 0x10000, scoped, tag = 'input window, operand 1, single buffered']
    #allocation6 [shape = 's32[1]{0}', space=sflag, size = 0x4, scoped, tag = 'scoped memory for tpu_custom_call.1']
    #allocation7 [shape = 'u8[4096]{0}', space=vmem, size = 0x1000, scoped, tag = 'output window, operand 0, single buffered']
    %8 = vsyncpa [#allocation3], 0
    %9 = vsyncpa [#allocation6], 0
    %10 = vsyncpa [#allocation4], 0
    // Predicated region
    $region2: #{tpu_custom_call.1} parent=1 // pred_check
      _
    $region3: #{tpu_custom_call.1} parent=1 // pred_check_branch
      %12 = sbr.rel (0) target = $region5
    $region4: #{tpu_custom_call.1} parent=1 // pred_region
      %s14 = ssub.s32 128, 128
      %15 = vsyncadd [#allocation3], %s14
      %s17 = sshll.u32 [#allocation2], 4
      %s18 = int_to_ptr.vmem [resolvable:$true] %s17
      %20 = dma.hbm_to_vmem [thread:$0]  %s0, 128, %s18, [#allocation3]
    $region5: #{tpu_custom_call.1} parent=1 // pred_fallthru
      _
    // Predicated region
    $region6: #{tpu_custom_call.1} parent=1 // pred_check
      _
    $region7: #{tpu_custom_call.1} parent=1 // pred_check_branch
      %22 = sbr.rel (0) target = $region9
    $region8: #{tpu_custom_call.1} parent=1 // pred_region
      %s24 = ssub.s32 2048, 2048
      %25 = vsyncadd [#allocation6], %s24
      %s26 = sshll.u32 [#allocation5], 4
      %s27 = int_to_ptr.vmem [resolvable:$true] %s26
      %32 = dma.hbm_to_vmem [thread:$0]  %s1, 2048, %s27, [#allocation6], 128, 128, 8
    $region9: #{tpu_custom_call.1} parent=1 // pred_fallthru
      _
    // Predicated region
    $region10: #{tpu_custom_call.1} parent=1 // pred_check
      _
    $region11: #{tpu_custom_call.1} parent=1 // pred_check_branch
      %34 = sbr.rel (0) target = $region13
    $region12: #{tpu_custom_call.1} parent=1 // pred_region
      _
    $region13: #{tpu_custom_call.1} parent=1 // pred_fallthru
      _
    // Predicated region
    $region14: #{tpu_custom_call.1} parent=1 // pred_check
      _
    $region15: #{tpu_custom_call.1} parent=1 // pred_check_branch
      %36 = sbr.rel (0) target = $region17
    $region16: #{tpu_custom_call.1} parent=1 // pred_region
      %37 = dma.done [#allocation3], 128
    $region17: #{tpu_custom_call.1} parent=1 // pred_fallthru
      _
    // Predicated region
    $region18: #{tpu_custom_call.1} parent=1 // pred_check
      _
    $region19: #{tpu_custom_call.1} parent=1 // pred_check_branch
      %39 = sbr.rel (0) target = $region21
    $region20: #{tpu_custom_call.1} parent=1 // pred_region
      %40 = dma.done [#allocation6], 2048
    $region21: #{tpu_custom_call.1} parent=1 // pred_fallthru
      _
    %v41 = vld [vmem:[#allocation2] sm:$0xff]
    %v42 = vld [vmem:[#allocation5] sm:$0xff]
    %v43 = vld [vmem:[#allocation5 + $0x8] sm:$0xff]
    %v44 = vld [vmem:[#allocation5 + $0x10] sm:$0xff]
    %v45 = vld [vmem:[#allocation5 + $0x18] sm:$0xff]
    %v46 = vld [vmem:[#allocation5 + $0x20] sm:$0xff]
    %v47 = vld [vmem:[#allocation5 + $0x28] sm:$0xff]
    %v48 = vld [vmem:[#allocation5 + $0x30] sm:$0xff]
    %v49 = vld [vmem:[#allocation5 + $0x38] sm:$0xff]
    %v50 = vld [vmem:[#allocation5 + $0x40] sm:$0xff]
    %v51 = vld [vmem:[#allocation5 + $0x48] sm:$0xff]
    %v52 = vld [vmem:[#allocation5 + $0x50] sm:$0xff]
    %v53 = vld [vmem:[#allocation5 + $0x58] sm:$0xff]
    %v54 = vld [vmem:[#allocation5 + $0x60] sm:$0xff]
    %v55 = vld [vmem:[#allocation5 + $0x68] sm:$0xff]
    %v56 = vld [vmem:[#allocation5 + $0x70] sm:$0xff]
    %v57 = vld [vmem:[#allocation5 + $0x78] sm:$0xff]
    %58 = vmatprep.subr.mxu0 0.0
    %59 = vmatpush1.msra.mxu0 %v57
    %60 = vmatprep.subr.mxu0 0.0
    %61 = vmatpush1.msra.mxu0 %v56
    %62 = vmatprep.subr.mxu0 0.0
    %63 = vmatpush1.msra.mxu0 %v55
    %64 = vmatprep.subr.mxu0 0.0
    %65 = vmatpush1.msra.mxu0 %v54
    %66 = vmatprep.subr.mxu0 0.0
    %67 = vmatpush1.msra.mxu0 %v53
    %68 = vmatprep.subr.mxu0 0.0
    %69 = vmatpush1.msra.mxu0 %v52
    %70 = vmatprep.subr.mxu0 0.0
    %71 = vmatpush1.msra.mxu0 %v51
    %72 = vmatprep.subr.mxu0 0.0
    %73 = vmatpush1.msra.mxu0 %v50
    %74 = vmatprep.subr.mxu0 0.0
    %75 = vmatpush1.msra.mxu0 %v49
    %76 = vmatprep.subr.mxu0 0.0
    %77 = vmatpush1.msra.mxu0 %v48
    %78 = vmatprep.subr.mxu0 0.0
    %79 = vmatpush1.msra.mxu0 %v47
    %80 = vmatprep.subr.mxu0 0.0
    %81 = vmatpush1.msra.mxu0 %v46
    %82 = vmatprep.subr.mxu0 0.0
    %83 = vmatpush1.msra.mxu0 %v45
    %84 = vmatprep.subr.mxu0 0.0
    %85 = vmatpush1.msra.mxu0 %v44
    %86 = vmatprep.subr.mxu0 0.0
    %87 = vmatpush1.msra.mxu0 %v43
    %88 = vmatprep.subr.mxu0 0.0
    %89 = vmatpush1.msra.mxu0 %v42
    %90 = vmatprep.subr.mxu0 0.0
    %91 = vmatpush2.msra.mxu0 0.0
    %92 = vmatprep.subr.mxu0 0.0
    %93 = vmatpush2.msra.mxu0 0.0
    %94 = vmatprep.subr.mxu0 0.0
    %95 = vmatpush2.msra.mxu0 0.0
    %96 = vmatprep.subr.mxu0 0.0
    %97 = vmatpush2.msra.mxu0 0.0
    %98 = vmatprep.subr.mxu0 0.0
    %99 = vmatpush2.msra.mxu0 0.0
    %100 = vmatprep.subr.mxu0 0.0
    %101 = vmatpush2.msra.mxu0 0.0
    %102 = vmatprep.subr.mxu0 0.0
    %103 = vmatpush2.msra.mxu0 0.0
    %104 = vmatprep.subr.mxu0 0.0
    %105 = vmatpush2.msra.mxu0 0.0
    %106 = vmatprep.subr.mxu0 0.0
    %107 = vmatpush2.msra.mxu0 0.0
    %108 = vmatprep.subr.mxu0 0.0
    %109 = vmatpush2.msra.mxu0 0.0
    %110 = vmatprep.subr.mxu0 0.0
    %111 = vmatpush2.msra.mxu0 0.0
    %112 = vmatprep.subr.mxu0 0.0
    %113 = vmatpush2.msra.mxu0 0.0
    %114 = vmatprep.subr.mxu0 0.0
    %115 = vmatpush2.msra.mxu0 0.0
    %116 = vmatprep.subr.mxu0 0.0
    %117 = vmatpush2.msra.mxu0 0.0
    %118 = vmatprep.subr.mxu0 0.0
    %119 = vmatpush2.msra.mxu0 0.0
    %120 = vmatprep.subr.mxu0 0.0
    %121 = vmatpush2.msra.mxu0 0.0
    %122 = vmatprep.mubr.f32.mxu0 0.0
    %123 = vmatmul.mubr.f32.gmra.mxu0 %v41
    %v124 = vpop.f32.mrf.mxu0
    %v125 = vadd.f32 0.0, %v124
    %v126 = vpop.f32.mrf.mxu0
    %127 = vdwg.mxu0
    %p128 = scmp.eq.s32.totalorder 0, 0
    // Predicated region
    $region22: #{tpu_custom_call.1} parent=1 // pred_check
      %p129 = pneg %p128
    $region23: #{tpu_custom_call.1} parent=1 // pred_check_branch
      %131 = sbr.rel (%p129) target = $region25
    $region24: #{tpu_custom_call.1} parent=1 // pred_region
      %132 = vst [vmem:[#allocation7] sm:$0xff] %v125
    $region25: #{tpu_custom_call.1} parent=1 // pred_fallthru
      _
    %p133 = scmp.gt.s32.totalorder 0, 0
    // Predicated region
    $region26: #{tpu_custom_call.1} parent=1 // pred_check
      %p134 = pneg %p133
    $region27: #{tpu_custom_call.1} parent=1 // pred_check_branch
      %136 = sbr.rel (%p134) target = $region29
    $region28: #{tpu_custom_call.1} parent=1 // pred_region
      %v137 = vld [vmem:[#allocation7] sm:$0xff]
      %v138 = vadd.f32 %v137, %v125
      %139 = vst [vmem:[#allocation7] sm:$0xff] %v138
    $region29: #{tpu_custom_call.1} parent=1 // pred_fallthru
      _
    // Predicated region
    $region30: #{tpu_custom_call.1} parent=1 // pred_check
      %p140 = pneg %p128
    $region31: #{tpu_custom_call.1} parent=1 // pred_check_branch
      %142 = sbr.rel (%p140) target = $region33
    $region32: #{tpu_custom_call.1} parent=1 // pred_region
      %v143 = vld [vmem:[#allocation7] sm:$0xff]
      %v144 = vld [vmem:[%s2] sm:$0x1]
      %v146 = vlaneseq
      %v147 = vshrl.u32 %v146, 7
      %v148 = vsub.s32 0, %v147
      %v149 = vrot.slane %v144, %v148
      %v151 = vadd.f32 %v143, %v149
      %152 = vst [vmem:[#allocation7] sm:$0xff] %v151
    $region33: #{tpu_custom_call.1} parent=1 // pred_fallthru
      _
    // Predicated region
    $region34: #{tpu_custom_call.1} parent=1 // pred_check
      _
    $region35: #{tpu_custom_call.1} parent=1 // pred_check_branch
      %154 = sbr.rel (0) target = $region37
    $region36: #{tpu_custom_call.1} parent=1 // pred_region
      %s156 = ssub.s32 128, 128
      %157 = vsyncadd [#allocation4], %s156
      %s159 = sshll.u32 [#allocation7], 4
      %s160 = int_to_ptr.vmem [resolvable:$true] %s159
      %162 = dma.vmem_to_hbm [thread:$0]  %s160, 128, %s3, [#allocation4]
    $region37: #{tpu_custom_call.1} parent=1 // pred_fallthru
      _
    // Predicated region
    $region38: #{tpu_custom_call.1} parent=1 // pred_check
      _
    $region39: #{tpu_custom_call.1} parent=1 // pred_check_branch
      %164 = sbr.rel (0) target = $region41
    $region40: #{tpu_custom_call.1} parent=1 // pred_region
      %165 = dma.done [#allocation4], 128
    $region41: #{tpu_custom_call.1} parent=1 // pred_fallthru
      _
    %166 = vsyncpa [#allocation3], 1
    %167 = vsyncpa [#allocation6], 1
    %168 = vsyncpa [#allocation4], 1

</llo_original>
